<compile_context>
chip_gen: v7x
topology: tpu7x:2x2x1
jax: 0.10.0
libtpu: 0.0.40
codegen_flags: <defaults>
</compile_context>

<pallas_src>
import jax
import jax.numpy as jnp
import numpy as np
from jax.experimental import pallas as pl
from jax.experimental.pallas import tpu as pltpu


# ----------------------------------------------------------------------------
# Kernel: plain linear with bias, x @ w_t + b.  Used for BOTH the noisy and
# the eval path (the noise is pre-fused into the cached weight/bias views).
# ----------------------------------------------------------------------------
def _linear_bias_kernel(x_ref, w_ref, b_ref, o_ref):
    y = jax.lax.dot_general(
        x_ref[...].astype(w_ref.dtype), w_ref[...],
        dimension_numbers=(((1,), (0,)), ((), ())),   # (B, K) @ (K, N)
        preferred_element_type=jnp.float32,
    )
    o_ref[...] = (y + b_ref[...].astype(jnp.float32)).astype(o_ref.dtype)


# ----------------------------------------------------------------------------
# Generation-aware VMEM budget and tile selection.
# ----------------------------------------------------------------------------
def _vmem_limit_bytes():
    try:
        cap = int(pltpu.get_tpu_info().vmem_capacity_bytes)
    except Exception:                                  # pragma: no cover
        cap = 64 * 1024 * 1024                         # conservative (v7x)
    # Leave headroom below the physical capacity; cap at 96 MiB on the
    # 128 MiB generations, ~48 MiB on v7x's 64 MiB parts.
    return min((cap * 3) // 4, 96 * 1024 * 1024)


def _pick_tile_n(n_out_pad, n_in, batch, w_itemsize, vmem_limit_bytes):
    """Largest n_out tile (multiple of 128, divisor of padded n_out) whose
    double-buffered streams fit the scoped VMEM limit."""
    budget = vmem_limit_bytes - 2 * batch * n_in * 4          # x tile (safe 2x)
    for t in (4096, 2048, 1024, 512, 256, 128):               # 256-multiples first
        if t > n_out_pad or n_out_pad % t != 0:
            continue
        need = 2 * n_in * t * w_itemsize                      # weight, 2 buffers
        need += 2 * batch * t * 4                             # output, 2 buffers
        need += 2 * 8 * t * 4                                 # bias row (8 sublanes)
        if need <= budget:
            return t
    return 128


def _round_up(n, m):
    return ((n + m - 1) // m) * m


def _pad_cols(a, n_pad):
    n = a.shape[-1]
    if n == n_pad:
        return a
    pad = [(0, 0)] * (a.ndim - 1) + [(0, n_pad - n)]
    return jnp.pad(a, pad)


# ----------------------------------------------------------------------------
# Forward wrapper
# ----------------------------------------------------------------------------
def noisy_linear_forward(x, params, *, training, use_noise, tile_n=None):
    """Pallas forward for NoisyLinear. `x`: (B, n_in) float32."""
    noisy = bool(training and use_noise)
    if noisy:
        w_t, b_row = params["w_eff_t"], params["b_eff_row"]
    else:
        w_t, b_row = params["w_mean_t"], params["b_mean_row"]

    n_in, n_out_pad = w_t.shape
    n_out = params["n_out"]
    B = x.shape[0]

    vmem_limit = _vmem_limit_bytes()
    if tile_n is None:
        tile_n = _pick_tile_n(n_out_pad, n_in, B,
                              jnp.dtype(w_t.dtype).itemsize, vmem_limit)
    assert n_out_pad % tile_n == 0 and tile_n % 128 == 0
    grid = (n_out_pad // tile_n,)

    x_spec = pl.BlockSpec((B, n_in), lambda j: (0, 0))         # batch-invariant
    w_spec = pl.BlockSpec((n_in, tile_n), lambda j: (0, j))    # blocked on n_out
    b_spec = pl.BlockSpec((1, tile_n), lambda j: (0, j))
    o_spec = pl.BlockSpec((B, tile_n), lambda j: (0, j))

    out = pl.pallas_call(
        _linear_bias_kernel,
        out_shape=jax.ShapeDtypeStruct((B, n_out_pad), jnp.float32),
        grid_spec=pltpu.PrefetchScalarGridSpec(
            num_scalar_prefetch=0,
            grid=grid,
            in_specs=[x_spec, w_spec, b_spec],
            out_specs=o_spec,
        ),
        compiler_params=pltpu.CompilerParams(
            dimension_semantics=("parallel",),
            vmem_limit_bytes=vmem_limit,
        ),
    )(x, w_t, b_row)

    if n_out_pad != n_out:
        out = out[:, :n_out]
    return out


# ----------------------------------------------------------------------------
# Parameter construction mirroring NoisyLinear.__init__ / reset_noise
# (synthetic init with jax.random; no checkpoint load).
# ----------------------------------------------------------------------------
def init_noisy_linear(key, n_in, n_out, noise_std=0.5, weight_dtype=jnp.float32):
    k_w, k_b, k_noise = jax.random.split(key, 3)

    w_mean = jax.random.uniform(k_w, (n_out, n_in), jnp.float32, -1.0, 1.0) / np.sqrt(n_in)
    w_std = jnp.full((n_out, n_in), noise_std / np.sqrt(n_in), jnp.float32)
    b_mean = jax.random.uniform(k_b, (n_out,), jnp.float32, -1.0, 1.0) / np.sqrt(n_in)
    b_std = jnp.full((n_out,), noise_std / np.sqrt(n_out), jnp.float32)

    params = dict(w_mean=w_mean, w_std=w_std, b_mean=b_mean, b_std=b_std)
    return reset_noise(params, k_noise, weight_dtype=weight_dtype)


def reset_noise(params, key, weight_dtype=None):
    """Refresh factored noise buffers and the fused / transposed kernel views.

    The cached views (w_eff_t, w_mean_t, b_eff_row, b_mean_row) must be
    re-fused here and after any optimizer update of w_mean / w_std / b_mean /
    b_std — exactly like the PyTorch buffers, they are derived caches kept in
    sync outside the forward.
    """
    n_out, n_in = params["w_mean"].shape
    if weight_dtype is None:
        weight_dtype = params.get("weight_dtype", jnp.float32)
    k_in, k_out = jax.random.split(key)

    def scaled(k, n):
        v = jax.random.normal(k, (n,), jnp.float32)
        return jnp.sign(v) * jnp.sqrt(jnp.abs(v))

    eps_in = scaled(k_in, n_in)
    eps_out = scaled(k_out, n_out)

    params = dict(params)
    params["w_eps"] = jnp.outer(eps_out, eps_in)
    params["b_eps"] = eps_out
    params["weight_dtype"] = weight_dtype
    return _refresh_derived(params)


def _refresh_derived(params):
    """Rebuild the fused, transposed, lane-padded views streamed by the kernel."""
    n_out, n_in = params["w_mean"].shape
    n_out_pad = _round_up(n_out, 128)
    wdt = params["weight_dtype"]

    w_eff = params["w_mean"] + params["w_std"] * params["w_eps"]
    b_eff = params["b_mean"] + params["b_std"] * params["b_eps"]

    params = dict(params)
    params["n_out"] = n_out
    params["w_mean_t"] = _pad_cols(params["w_mean"].T.astype(wdt), n_out_pad)   # (n_in, n_out_pad)
    params["w_eff_t"] = _pad_cols(w_eff.T.astype(wdt), n_out_pad)               # (n_in, n_out_pad)
    params["b_mean_row"] = _pad_cols(params["b_mean"].reshape(1, n_out), n_out_pad)
    params["b_eff_row"] = _pad_cols(b_eff.reshape(1, n_out), n_out_pad)
    return params


def _reference(x, p, training, use_noise):
    if training and use_noise:
        w = p["w_mean"] + p["w_std"] * p["w_eps"]
        b = p["b_mean"] + p["b_std"] * p["b_eps"]
    else:
        w, b = p["w_mean"], p["b_mean"]
    return x @ w.T + b


if __name__ == "__main__":
    key = jax.random.PRNGKey(0)
    k_p1, k_p2, k_p3, k_x1, k_x2, k_x3 = jax.random.split(key, 6)

    # --- Small case (n_out=64 -> padded to 128, grid=(1,)) -----------------
    B, n_in, n_out = 8, 32, 64
    params = init_noisy_linear(k_p1, n_in, n_out, noise_std=0.5)
    x = jax.random.normal(k_x1, (B, n_in), jnp.float32)

    y_noisy = jax.block_until_ready(
        noisy_linear_forward(x, params, training=True, use_noise=True))
    y_eval = jax.block_until_ready(
        noisy_linear_forward(x, params, training=False, use_noise=True))

    np.testing.assert_allclose(np.asarray(y_noisy),
                               np.asarray(_reference(x, params, True, True)),
                               rtol=1e-5, atol=1e-5)
    np.testing.assert_allclose(np.asarray(y_eval),
                               np.asarray(_reference(x, params, False, True)),
                               rtol=1e-5, atol=1e-5)

    # --- Tiled / pipelined n_out path (grid=(2,), forced tile_n=128) -------
    B2, n_in2, n_out2 = 16, 128, 256
    params2 = init_noisy_linear(k_p2, n_in2, n_out2, noise_std=0.5)
    x2 = jax.random.normal(k_x2, (B2, n_in2), jnp.float32)
    y2 = jax.block_until_ready(
        noisy_linear_forward(x2, params2, training=True, use_noise=True, tile_n=128))
    np.testing.assert_allclose(np.asarray(y2),
                               np.asarray(_reference(x2, params2, True, True)),
                               rtol=1e-4, atol=1e-4)

    # --- bf16 weight-stream path (half the HBM bytes; f32 MXU accumulate) --
    B3, n_in3, n_out3 = 8, 64, 192          # 192 -> padded to 256
    params3 = init_noisy_linear(k_p3, n_in3, n_out3, noise_std=0.5,
                                weight_dtype=jnp.bfloat16)
    x3 = jax.random.normal(k_x3, (B3, n_in3), jnp.float32)
    y3 = jax.block_until_ready(
        noisy_linear_forward(x3, params3, training=True, use_noise=True))
    np.testing.assert_allclose(np.asarray(y3),
                               np.asarray(_reference(x3, params3, True, True)),
                               rtol=2e-2, atol=2e-2)

    print("KERNEL_OK")
</pallas_src>

<mosaic_0001>
module attributes {stable_mosaic.version = 11 : i64} {
  func.func @_linear_bias_kernel(%arg0: i32, %arg1: memref<8x32xf32, #tpu.memory_space<vmem>>, %arg2: memref<32x128xf32, #tpu.memory_space<vmem>>, %arg3: memref<1x128xf32, #tpu.memory_space<vmem>>, %arg4: memref<8x128xf32, #tpu.memory_space<vmem>>) attributes {dimension_semantics = [#tpu.dimension_semantics<parallel>], iteration_bounds = array<i64: 1>, scalar_prefetch = 0 : i64, scratch_operands = 0 : i64, tpu.core_type = #tpu.core_type<tc>, window_params = [{pipeline_mode = #tpu.pipeline_mode<synchronous>, transform_indices = @transform_0, window_bounds = array<i64: 8, 32>}, {transform_indices = @transform_1, window_bounds = array<i64: 32, 128>}, {transform_indices = @transform_2, window_bounds = array<i64: 1, 128>}, {transform_indices = @transform_3, window_bounds = array<i64: 8, 128>}]} {
    %c0 = arith.constant 0 : index
    %c0_0 = arith.constant 0 : index
    %0 = vector.load %arg1[%c0, %c0_0] : memref<8x32xf32, #tpu.memory_space<vmem>>, vector<8x32xf32>
    %c0_1 = arith.constant 0 : index
    %c0_2 = arith.constant 0 : index
    %1 = vector.load %arg2[%c0_1, %c0_2] : memref<32x128xf32, #tpu.memory_space<vmem>>, vector<32x128xf32>
    %cst = arith.constant dense<0.000000e+00> : vector<8x128xf32>
    %2 = tpu.matmul %0, %1, %cst {dimension_numbers = #tpu.dot_dimension_numbers<[1], [0], [0], [1], [0, 0, 1, 1], [], []>} : vector<8x32xf32>, vector<32x128xf32>, vector<8x128xf32> -> vector<8x128xf32>
    %c0_3 = arith.constant 0 : index
    %c0_4 = arith.constant 0 : index
    %3 = vector.load %arg3[%c0_3, %c0_4] : memref<1x128xf32, #tpu.memory_space<vmem>>, vector<1x128xf32>
    %4 = vector.broadcast %3 : vector<1x128xf32> to vector<8x128xf32>
    %5 = arith.addf %2, %4 : vector<8x128xf32>
    %c0_5 = arith.constant 0 : index
    %c0_6 = arith.constant 0 : index
    %6 = vector.load %arg4[%c0_5, %c0_6] : memref<8x128xf32, #tpu.memory_space<vmem>>, vector<8x128xf32>
    tpu.vector_store %arg4[%c0_5, %c0_6], %5 {strides = array<i32>} : memref<8x128xf32, #tpu.memory_space<vmem>>, vector<8x128xf32>,
    return
  }
  func.func @transform_0(%arg0: i32) -> (i32, i32) {
    %c0_i32 = arith.constant 0 : i32
    %c0_i32_0 = arith.constant 0 : i32
    %c0_i32_1 = arith.constant 0 : i32
    return %c0_i32, %c0_i32_0 : i32, i32
  }
  func.func @transform_1(%arg0: i32) -> (i32, i32) {
    %c0_i32 = arith.constant 0 : i32
    %c0_i32_0 = arith.constant 0 : i32
    return %c0_i32, %arg0 : i32, i32
  }
  func.func @transform_2(%arg0: i32) -> (i32, i32) {
    %c0_i32 = arith.constant 0 : i32
    %c0_i32_0 = arith.constant 0 : i32
    return %c0_i32, %arg0 : i32, i32
  }
  func.func @transform_3(%arg0: i32) -> (i32, i32) {
    %c0_i32 = arith.constant 0 : i32
    %c0_i32_0 = arith.constant 0 : i32
    return %c0_i32, %arg0 : i32, i32
  }
}

</mosaic_0001>

<llo_original>
// kernel: tpu_custom_call.1
$region0: #{tpu_custom_call.1}
  #allocation0 [shape = 'u32[]', space=smem, size = 0x4, offset = 0x4, fixed_abs, tag = 'smem constant byte address 0x4 - core index']
  #allocation1 [shape = 'u32[144,128]{1,0:T(1,128)}', space=vmem, size = 0x12000, scoped, tag = 'internal scratch']
  %s0 = inlined_call_operand.hbm [shape: f32[8,32], index: 0, kind: input, shape index: {}]
  %s1 = inlined_call_operand.hbm [shape: f32[32,128], index: 1, kind: input, shape index: {}]
  %s2 = inlined_call_operand.vmem [shape: f32[1,128], index: 2, kind: input, shape index: {}]
  %s3 = inlined_call_operand.hbm [shape: f32[8,128], index: 3, kind: output, shape index: {}]
  %s4 = sld [smem:[#allocation0]]
  $region30: #{tpu_custom_call.1} parent=0
    _
  %s6 = ssub.s32 1, %s4
  %s7 = scalar_select 0, %s6, %s4
  $region1: #{tpu_custom_call.1} parent=0
    #allocation2 [shape = 'u8[4096]{0}', space=vmem, size = 0x1000, scoped, tag = 'input window, operand 0, single buffered']
    #allocation3 [shape = 's32[1]{0}', space=sflag, size = 0x4, scoped, tag = 'scoped memory for tpu_custom_call.1']
    #allocation4 [shape = 's32[1]{0}', space=sflag, size = 0x4, scoped, tag = 'scoped memory for tpu_custom_call.1']
    #allocation5 [shape = 'u8[16384]{0}', space=vmem, size = 0x4000, scoped, tag = 'input window, operand 1, single buffered']
    #allocation6 [shape = 's32[1]{0}', space=sflag, size = 0x4, scoped, tag = 'scoped memory for tpu_custom_call.1']
    #allocation7 [shape = 'u8[4096]{0}', space=vmem, size = 0x1000, scoped, tag = 'output window, operand 0, single buffered']
    %8 = vsyncpa [#allocation3], 0
    %9 = vsyncpa [#allocation6], 0
    %10 = vsyncpa [#allocation4], 0
    // Predicated region
    $region2: #{tpu_custom_call.1} parent=1 // pred_check
      _
    $region3: #{tpu_custom_call.1} parent=1 // pred_check_branch
      %12 = sbr.rel (0) target = $region5
    $region4: #{tpu_custom_call.1} parent=1 // pred_region
      %s14 = ssub.s32 128, 128
      %15 = vsyncadd [#allocation3], %s14
      %s17 = sshll.u32 [#allocation2], 4
      %s18 = int_to_ptr.vmem [resolvable:$true] %s17
      %20 = dma.hbm_to_vmem [thread:$0]  %s0, 128, %s18, [#allocation3]
    $region5: #{tpu_custom_call.1} parent=1 // pred_fallthru
      _
    // Predicated region
    $region6: #{tpu_custom_call.1} parent=1 // pred_check
      _
    $region7: #{tpu_custom_call.1} parent=1 // pred_check_branch
      %22 = sbr.rel (0) target = $region9
    $region8: #{tpu_custom_call.1} parent=1 // pred_region
      %s24 = ssub.s32 512, 512
      %25 = vsyncadd [#allocation6], %s24
      %s26 = sshll.u32 [#allocation5], 4
      %s27 = int_to_ptr.vmem [resolvable:$true] %s26
      %32 = dma.hbm_to_vmem [thread:$0]  %s1, 512, %s27, [#allocation6], 128, 128, 8
    $region9: #{tpu_custom_call.1} parent=1 // pred_fallthru
      _
    // Predicated region
    $region10: #{tpu_custom_call.1} parent=1 // pred_check
      _
    $region11: #{tpu_custom_call.1} parent=1 // pred_check_branch
      %34 = sbr.rel (0) target = $region13
    $region12: #{tpu_custom_call.1} parent=1 // pred_region
      _
    $region13: #{tpu_custom_call.1} parent=1 // pred_fallthru
      _
    // Predicated region
    $region14: #{tpu_custom_call.1} parent=1 // pred_check
      _
    $region15: #{tpu_custom_call.1} parent=1 // pred_check_branch
      %36 = sbr.rel (0) target = $region17
    $region16: #{tpu_custom_call.1} parent=1 // pred_region
      %37 = dma.done [#allocation3], 128
    $region17: #{tpu_custom_call.1} parent=1 // pred_fallthru
      _
    // Predicated region
    $region18: #{tpu_custom_call.1} parent=1 // pred_check
      _
    $region19: #{tpu_custom_call.1} parent=1 // pred_check_branch
      %39 = sbr.rel (0) target = $region21
    $region20: #{tpu_custom_call.1} parent=1 // pred_region
      %40 = dma.done [#allocation6], 512
    $region21: #{tpu_custom_call.1} parent=1 // pred_fallthru
      _
    %v41 = vld [vmem:[#allocation2] sm:$0xff]
    %v42 = vld [vmem:[#allocation5] sm:$0xff]
    %v43 = vld [vmem:[#allocation5 + $0x8] sm:$0xff]
    %v44 = vld [vmem:[#allocation5 + $0x10] sm:$0xff]
    %v45 = vld [vmem:[#allocation5 + $0x18] sm:$0xff]
    %v46 = vld [vmem:[%s2] sm:$0x1]
    %v48 = vlaneseq
    %v49 = vshrl.u32 %v48, 7
    %v50 = vsub.s32 0, %v49
    %v51 = vrot.slane %v46, %v50
    %vm53 = vcmask 261120
    %v55 = vsel %vm53, %v41, 0
    %57 = vmatprep.subr.mxu0 0.0
    %58 = vmatpush1.msra.mxu0 %v42
    %59 = vmatprep.subr.mxu0 0.0
    %60 = vmatpush1.msra.mxu0 %v43
    %61 = vmatprep.subr.mxu0 0.0
    %62 = vmatpush1.msra.mxu0 %v44
    %63 = vmatprep.subr.mxu0 0.0
    %64 = vmatpush1.msra.mxu0 %v45
    %65 = vmatprep.subr.mxu0 0.0
    %66 = vmatpush1.msra.mxu0 0.0
    %67 = vmatprep.subr.mxu0 0.0
    %68 = vmatpush1.msra.mxu0 0.0
    %69 = vmatprep.subr.mxu0 0.0
    %70 = vmatpush1.msra.mxu0 0.0
    %71 = vmatprep.subr.mxu0 0.0
    %72 = vmatpush1.msra.mxu0 0.0
    %73 = vmatprep.subr.mxu0 0.0
    %74 = vmatpush1.msra.mxu0 0.0
    %75 = vmatprep.subr.mxu0 0.0
    %76 = vmatpush1.msra.mxu0 0.0
    %77 = vmatprep.subr.mxu0 0.0
    %78 = vmatpush1.msra.mxu0 0.0
    %79 = vmatprep.subr.mxu0 0.0
    %80 = vmatpush1.msra.mxu0 0.0
    %81 = vmatprep.subr.mxu0 0.0
    %82 = vmatpush1.msra.mxu0 0.0
    %83 = vmatprep.subr.mxu0 0.0
    %84 = vmatpush1.msra.mxu0 0.0
    %85 = vmatprep.subr.mxu0 0.0
    %86 = vmatpush1.msra.mxu0 0.0
    %87 = vmatprep.subr.mxu0 0.0
    %88 = vmatpush1.msra.mxu0 0.0
    %89 = vmatprep.subr.mxu0 0.0
    %90 = vmatpush1.msra.mxu0 0.0
    %91 = vmatprep.subr.mxu0 0.0
    %92 = vmatpush1.msra.mxu0 0.0
    %93 = vmatprep.subr.mxu0 0.0
    %94 = vmatpush1.msra.mxu0 0.0
    %95 = vmatprep.subr.mxu0 0.0
    %96 = vmatpush1.msra.mxu0 0.0
    %97 = vmatprep.subr.mxu0 0.0
    %98 = vmatpush1.msra.mxu0 0.0
    %99 = vmatprep.subr.mxu0 0.0
    %100 = vmatpush1.msra.mxu0 0.0
    %101 = vmatprep.subr.mxu0 0.0
    %102 = vmatpush1.msra.mxu0 0.0
    %103 = vmatprep.subr.mxu0 0.0
    %104 = vmatpush1.msra.mxu0 0.0
    %105 = vmatprep.subr.mxu0 0.0
    %106 = vmatpush1.msra.mxu0 0.0
    %107 = vmatprep.subr.mxu0 0.0
    %108 = vmatpush1.msra.mxu0 0.0
    %109 = vmatprep.subr.mxu0 0.0
    %110 = vmatpush1.msra.mxu0 0.0
    %111 = vmatprep.subr.mxu0 0.0
    %112 = vmatpush1.msra.mxu0 0.0
    %113 = vmatprep.subr.mxu0 0.0
    %114 = vmatpush1.msra.mxu0 0.0
    %115 = vmatprep.subr.mxu0 0.0
    %116 = vmatpush1.msra.mxu0 0.0
    %117 = vmatprep.subr.mxu0 0.0
    %118 = vmatpush1.msra.mxu0 0.0
    %119 = vmatprep.subr.mxu0 0.0
    %120 = vmatpush1.msra.mxu0 0.0
    %121 = vmatprep.mubr.f32.mxu0 0.0
    %122 = vmatmul.mubr.f32.gmra.mrb[0].mxu0 %v55
    %v123 = vpop.f32.mrb[0].mxu0
    %v124 = vadd.f32 %v51, %v123
    %v125 = vpop.f32.mrb[0].mxu0
    %126 = vdwg.mxu0
    %127 = vst [vmem:[#allocation7] sm:$0xff] %v124
    // Predicated region
    $region22: #{tpu_custom_call.1} parent=1 // pred_check
      _
    $region23: #{tpu_custom_call.1} parent=1 // pred_check_branch
      %129 = sbr.rel (0) target = $region25
    $region24: #{tpu_custom_call.1} parent=1 // pred_region
      %s131 = ssub.s32 128, 128
      %132 = vsyncadd [#allocation4], %s131
      %s134 = sshll.u32 [#allocation7], 4
      %s135 = int_to_ptr.vmem [resolvable:$true] %s134
      %137 = dma.vmem_to_hbm [thread:$0]  %s135, 128, %s3, [#allocation4]
    $region25: #{tpu_custom_call.1} parent=1 // pred_fallthru
      _
    // Predicated region
    $region26: #{tpu_custom_call.1} parent=1 // pred_check
      _
    $region27: #{tpu_custom_call.1} parent=1 // pred_check_branch
      %139 = sbr.rel (0) target = $region29
    $region28: #{tpu_custom_call.1} parent=1 // pred_region
      %140 = dma.done [#allocation4], 128
    $region29: #{tpu_custom_call.1} parent=1 // pred_fallthru
      _
    %141 = vsyncpa [#allocation3], 1
    %142 = vsyncpa [#allocation6], 1
    %143 = vsyncpa [#allocation4], 1

</llo_original>
